<compile_context>
chip_gen: v6e
topology: v6e:2x2x1
jax: 0.10.0
libtpu: 0.0.40
codegen_flags: <defaults>
</compile_context>

<pallas_src>
import functools

import jax
import jax.numpy as jnp
from jax.experimental import pallas as pl

M_PAD = 8     # sublane-aligned rows
LANE = 128    # lane-aligned columns


def mycell_kernel(x_ref, h_ref, w_ref, o_ref, *, m_real, k_real):
    # x_ref: (8,128) f32, real data in [:m_real, :k_real]
    # h_ref: (8,128) f32, real data in [:m_real, :n_real]
    # w_ref: (8,128) f32, rows [0:k_real) = W^T (in,out), row k_real = bias b
    x = x_ref[...]
    h = h_ref[...]
    w = w_ref[...]

    # VPU broadcast-FMA contraction over K (K=4 is far too small for the MXU).
    acc = x[:, 0:1] * w[0:1, :]
    for k in range(1, k_real):                      # static unroll
        acc = acc + x[:, k : k + 1] * w[k : k + 1, :]

    bias = w[k_real : k_real + 1, :]                # (1,128), real in [:, :n_real]

    # MyDecisionGate: sign of the GLOBAL sum of y = x@W^T + b over real elems.
    # Padded rows/cols of `acc` are exactly zero (zero-padded x rows, zero-
    # padded W columns), so sum(acc) == real matmul sum; the bias adds
    # m_real * sum(b) (padded bias lanes are zero).
    s = jnp.sum(acc) + jnp.float32(m_real) * jnp.sum(bias)
    sign = jnp.where(s > 0.0, jnp.float32(1.0), jnp.float32(-1.0))

    y = acc + bias                                  # broadcast add (VPU)
    o_ref[...] = jnp.tanh(sign * y + h)             # EUP tanh, unmasked vst


@jax.jit
def mycell_forward(x, h, w, b):
    """x: (M, K), h: (M, N), w: (N, K) PyTorch-style (out, in), b: (N,)."""
    M, K = x.shape
    N = w.shape[0]

    # One-time layout plumbing: pad everything to a single (8, 128) tile.
    x_pad = jnp.zeros((M_PAD, LANE), jnp.float32).at[:M, :K].set(
        x.astype(jnp.float32))
    h_pad = jnp.zeros((M_PAD, LANE), jnp.float32).at[:M, :N].set(
        h.astype(jnp.float32))
    # Augmented weight tile: rows [0:K) hold W^T, row K holds the bias.
    w_aug = (
        jnp.zeros((M_PAD, LANE), jnp.float32)
        .at[:K, :N].set(w.T.astype(jnp.float32))
        .at[K, :N].set(b.astype(jnp.float32))
    )

    out_pad = pl.pallas_call(
        functools.partial(mycell_kernel, m_real=M, k_real=K),
        out_shape=jax.ShapeDtypeStruct((M_PAD, LANE), jnp.float32),
        in_specs=[
            pl.BlockSpec((M_PAD, LANE), lambda: (0, 0)),
            pl.BlockSpec((M_PAD, LANE), lambda: (0, 0)),
            pl.BlockSpec((M_PAD, LANE), lambda: (0, 0)),
        ],
        out_specs=pl.BlockSpec((M_PAD, LANE), lambda: (0, 0)),
    )(x_pad, h_pad, w_aug)

    new_h = out_pad[:M, :N]
    # Module returns (new_h, new_h)
    return new_h, new_h


if __name__ == "__main__":
    key = jax.random.PRNGKey(0)
    kx, kh, kw, kb = jax.random.split(key, 4)

    # Shapes implied by the module: x, h in (3, 4); Linear(4, 4).
    M, F = 3, 4
    x = jax.random.uniform(kx, (M, F), dtype=jnp.float32)
    h = jax.random.uniform(kh, (M, F), dtype=jnp.float32)

    # Deterministic parameter init (mimics PyTorch Linear's U(-1/sqrt(in), .)).
    bound = 1.0 / jnp.sqrt(jnp.float32(F))
    w = jax.random.uniform(kw, (F, F), minval=-bound, maxval=bound,
                           dtype=jnp.float32)
    b = jax.random.uniform(kb, (F,), minval=-bound, maxval=bound,
                           dtype=jnp.float32)

    new_h, new_h2 = mycell_forward(x, h, w, b)
    jax.block_until_ready(new_h)

    # Reference check in plain JAX.
    y_ref = x @ w.T + b
    gated_ref = jnp.where(jnp.sum(y_ref) > 0, y_ref, -y_ref)
    ref = jnp.tanh(gated_ref + h)
    assert jnp.allclose(new_h, ref, atol=1e-5), "mismatch vs reference"
    assert jnp.array_equal(new_h, new_h2)

    print("KERNEL_OK")
</pallas_src>

<mosaic_0001>
module attributes {stable_mosaic.version = 11 : i64} {
  func.func @mycell_kernel(%arg0: memref<8x128xf32, #tpu.memory_space<vmem>>, %arg1: memref<8x128xf32, #tpu.memory_space<vmem>>, %arg2: memref<8x128xf32, #tpu.memory_space<vmem>>, %arg3: memref<8x128xf32, #tpu.memory_space<vmem>>) attributes {dimension_semantics = [], scalar_prefetch = 0 : i64, scratch_operands = 0 : i64, tpu.core_type = #tpu.core_type<tc>} {
    %c0 = arith.constant 0 : index
    %c0_0 = arith.constant 0 : index
    %0 = vector.load %arg0[%c0, %c0_0] : memref<8x128xf32, #tpu.memory_space<vmem>>, vector<8x128xf32>
    %c0_1 = arith.constant 0 : index
    %c0_2 = arith.constant 0 : index
    %1 = vector.load %arg1[%c0_1, %c0_2] : memref<8x128xf32, #tpu.memory_space<vmem>>, vector<8x128xf32>
    %c0_3 = arith.constant 0 : index
    %c0_4 = arith.constant 0 : index
    %2 = vector.load %arg2[%c0_3, %c0_4] : memref<8x128xf32, #tpu.memory_space<vmem>>, vector<8x128xf32>
    %3 = vector.extract_strided_slice %0 {offsets = [0, 0], sizes = [8, 1], strides = [1, 1]} : vector<8x128xf32> to vector<8x1xf32>
    %4 = vector.extract_strided_slice %2 {offsets = [0, 0], sizes = [1, 128], strides = [1, 1]} : vector<8x128xf32> to vector<1x128xf32>
    %5 = vector.broadcast %3 : vector<8x1xf32> to vector<8x128xf32>
    %6 = vector.broadcast %4 : vector<1x128xf32> to vector<8x128xf32>
    %7 = arith.mulf %5, %6 : vector<8x128xf32>
    %8 = vector.extract_strided_slice %0 {offsets = [0, 1], sizes = [8, 1], strides = [1, 1]} : vector<8x128xf32> to vector<8x1xf32>
    %9 = vector.extract_strided_slice %2 {offsets = [1, 0], sizes = [1, 128], strides = [1, 1]} : vector<8x128xf32> to vector<1x128xf32>
    %10 = vector.broadcast %8 : vector<8x1xf32> to vector<8x128xf32>
    %11 = vector.broadcast %9 : vector<1x128xf32> to vector<8x128xf32>
    %12 = arith.mulf %10, %11 : vector<8x128xf32>
    %13 = arith.addf %7, %12 : vector<8x128xf32>
    %14 = vector.extract_strided_slice %0 {offsets = [0, 2], sizes = [8, 1], strides = [1, 1]} : vector<8x128xf32> to vector<8x1xf32>
    %15 = vector.extract_strided_slice %2 {offsets = [2, 0], sizes = [1, 128], strides = [1, 1]} : vector<8x128xf32> to vector<1x128xf32>
    %16 = vector.broadcast %14 : vector<8x1xf32> to vector<8x128xf32>
    %17 = vector.broadcast %15 : vector<1x128xf32> to vector<8x128xf32>
    %18 = arith.mulf %16, %17 : vector<8x128xf32>
    %19 = arith.addf %13, %18 : vector<8x128xf32>
    %20 = vector.extract_strided_slice %0 {offsets = [0, 3], sizes = [8, 1], strides = [1, 1]} : vector<8x128xf32> to vector<8x1xf32>
    %21 = vector.extract_strided_slice %2 {offsets = [3, 0], sizes = [1, 128], strides = [1, 1]} : vector<8x128xf32> to vector<1x128xf32>
    %22 = vector.broadcast %20 : vector<8x1xf32> to vector<8x128xf32>
    %23 = vector.broadcast %21 : vector<1x128xf32> to vector<8x128xf32>
    %24 = arith.mulf %22, %23 : vector<8x128xf32>
    %25 = arith.addf %19, %24 : vector<8x128xf32>
    %26 = vector.extract_strided_slice %2 {offsets = [4, 0], sizes = [1, 128], strides = [1, 1]} : vector<8x128xf32> to vector<1x128xf32>
    %27 = vector.shape_cast %25 : vector<8x128xf32> to vector<1x8x128xf32>
    %cst = arith.constant dense<0.000000e+00> : vector<1xf32>
    %28 = vector.multi_reduction <add>, %27, %cst [1, 2] : vector<1x8x128xf32> to vector<1xf32>
    %29 = vector.shape_cast %28 : vector<1xf32> to vector<1x1x1xf32>
    %30 = vector.extract %29[0, 0, 0] : f32 from vector<1x1x1xf32>
    %31 = vector.shape_cast %26 : vector<1x128xf32> to vector<1x1x128xf32>
    %cst_5 = arith.constant dense<0.000000e+00> : vector<1xf32>
    %32 = vector.multi_reduction <add>, %31, %cst_5 [1, 2] : vector<1x1x128xf32> to vector<1xf32>
    %33 = vector.shape_cast %32 : vector<1xf32> to vector<1x1x1xf32>
    %34 = vector.extract %33[0, 0, 0] : f32 from vector<1x1x1xf32>
    %cst_6 = arith.constant 3.000000e+00 : f32
    %35 = arith.mulf %cst_6, %34 : f32
    %36 = arith.addf %30, %35 : f32
    %cst_7 = arith.constant 0.000000e+00 : f32
    %37 = arith.cmpf ogt, %36, %cst_7 : f32
    %cst_8 = arith.constant 1.000000e+00 : f32
    %cst_9 = arith.constant -1.000000e+00 : f32
    %38 = arith.select %37, %cst_8, %cst_9 : f32
    %39 = vector.broadcast %26 : vector<1x128xf32> to vector<8x128xf32>
    %40 = arith.addf %25, %39 : vector<8x128xf32>
    %41 = vector.broadcast %38 : f32 to vector<8x128xf32>
    %42 = arith.mulf %41, %40 : vector<8x128xf32>
    %43 = arith.addf %42, %1 : vector<8x128xf32>
    %44 = math.tanh %43 : vector<8x128xf32>
    %c0_10 = arith.constant 0 : index
    %c0_11 = arith.constant 0 : index
    %45 = vector.load %arg3[%c0_10, %c0_11] : memref<8x128xf32, #tpu.memory_space<vmem>>, vector<8x128xf32>
    tpu.vector_store %arg3[%c0_10, %c0_11], %44 {strides = array<i32>} : memref<8x128xf32, #tpu.memory_space<vmem>>, vector<8x128xf32>,
    return
  }
}

</mosaic_0001>

<llo_original>
// kernel: mycell_forward.1
$region0: #{mycell_forward.1}
  #allocation0 [shape = 'u32[]', space=smem, size = 0x4, offset = 0x4, fixed_abs, tag = 'smem constant byte address 0x4 - core index']
  #allocation1 [shape = 'u32[144,128]{1,0:T(1,128)}', space=vmem, size = 0x12000, scoped, tag = 'internal scratch']
  %s0 = inlined_call_operand.vmem [shape: f32[8,128], index: 0, kind: input, shape index: {}]
  %s1 = inlined_call_operand.vmem [shape: f32[8,128], index: 1, kind: input, shape index: {}]
  %s2 = inlined_call_operand.vmem [shape: f32[8,128], index: 2, kind: input, shape index: {}]
  %s3 = inlined_call_operand.vmem [shape: f32[8,128], index: 3, kind: output, shape index: {}]
  %s4 = sld [smem:[#allocation0]]
  $region22: #{mycell_forward.1} parent=0
    _
  %s6 = ssub.s32 1, %s4
  %s7 = scalar_select 0, %s6, %s4
  // Predicated region
  $region2: #{mycell_forward.1} parent=0 // pred_check
    _
  $region3: #{mycell_forward.1} parent=0 // pred_check_branch
    %9 = sbr.rel (0) target = $region5
  $region4: #{mycell_forward.1} parent=0 // pred_region
    _
  $region5: #{mycell_forward.1} parent=0 // pred_fallthru
    _
  // Predicated region
  $region6: #{mycell_forward.1} parent=0 // pred_check
    _
  $region7: #{mycell_forward.1} parent=0 // pred_check_branch
    %11 = sbr.rel (0) target = $region9
  $region8: #{mycell_forward.1} parent=0 // pred_region
    _
  $region9: #{mycell_forward.1} parent=0 // pred_fallthru
    _
  // Predicated region
  $region10: #{mycell_forward.1} parent=0 // pred_check
    _
  $region11: #{mycell_forward.1} parent=0 // pred_check_branch
    %13 = sbr.rel (0) target = $region13
  $region12: #{mycell_forward.1} parent=0 // pred_region
    _
  $region13: #{mycell_forward.1} parent=0 // pred_fallthru
    _
  %v14 = vld [vmem:[%s0] sm:$0xff]
  %v15 = vld [vmem:[%s1] sm:$0xff]
  %v16 = vld [vmem:[%s2] sm:$0xff]
  %18 = vset.pattern.permute.xlu0 0
  %19 = vperm.xlu0 %18, %v14
  %v20 = vpop.permute.xlu0 %19
  %v22 = vlaneseq
  %v23 = vshrl.u32 %v22, 7
  %v24 = vsub.s32 0, %v23
  %v25 = vrot.slane %v16, %v24
  %v26 = vmul.f32 %v20, %v25
  %27 = vset.pattern.permute.xlu0 1
  %28 = vperm.xlu0 %27, %v14
  %v29 = vpop.permute.xlu0 %28
  %v31 = vlaneseq
  %v32 = vshrl.u32 %v31, 7
  %v33 = vsub.s32 1, %v32
  %v34 = vrot.slane %v16, %v33
  %v35 = vmul.f32 %v29, %v34
  %v36 = vadd.f32 %v26, %v35
  %37 = vset.pattern.permute.xlu0 2
  %38 = vperm.xlu0 %37, %v14
  %v39 = vpop.permute.xlu0 %38
  %v41 = vlaneseq
  %v42 = vshrl.u32 %v41, 7
  %v43 = vsub.s32 2, %v42
  %v44 = vrot.slane %v16, %v43
  %v45 = vmul.f32 %v39, %v44
  %v46 = vadd.f32 %v36, %v45
  %47 = vset.pattern.permute.xlu0 3
  %48 = vperm.xlu0 %47, %v14
  %v49 = vpop.permute.xlu0 %48
  %v51 = vlaneseq
  %v52 = vshrl.u32 %v51, 7
  %v53 = vsub.s32 3, %v52
  %v54 = vrot.slane %v16, %v53
  %v55 = vmul.f32 %v49, %v54
  %v56 = vadd.f32 %v46, %v55
  %57 = vadd.xlane.f32.xlu0 %v56
  %v58 = vpop.xlane.xlu0 %57
  %v59 = vrot.slane %v58, 4
  %v60 = vadd.f32 %v58, %v59
  %v61 = vrot.slane %v60, 2
  %v62 = vadd.f32 %v60, %v61
  %v63 = vrot.slane %v62, 1
  %v64 = vadd.f32 %v62, %v63
  %s65 = vtos %v64
  %v67 = vrot.slane %v16, 4
  %vm69 = vcmask 1040384
  %v70 = vsel %vm69, %v67, 0.0
  %71 = vadd.xlane.f32.xlu0 %v70
  %v72 = vpop.xlane.xlu0 %71
  %v73 = vrot.slane %v72, 4
  %v74 = vadd.f32 %v72, %v73
  %v75 = vrot.slane %v74, 2
  %v76 = vadd.f32 %v74, %v75
  %v77 = vrot.slane %v76, 1
  %v78 = vadd.f32 %v76, %v77
  %s79 = vtos %v78
  %s80 = smul.f32 %s79, 3.0
  %s81 = sadd.f32 %s65, %s80
  %p82 = scmp.gt.f32.partialorder %s81, 0.0
  %s83 = scalar_select %p82, 1.0, -1.0
  %v84 = vlaneseq
  %v85 = vshrl.u32 %v84, 7
  %v86 = vsub.s32 4, %v85
  %v87 = vrot.slane %v16, %v86
  %v88 = vadd.f32 %v56, %v87
  %v89 = vstv %s83
  %v90 = vmul.f32 %v89, %v88
  %v91 = vadd.f32 %v90, %v15
  %v92 = vtanh.pop %v91
  %93 = vst [vmem:[%s3] sm:$0xff] %v92
  // Predicated region
  $region14: #{mycell_forward.1} parent=0 // pred_check
    _
  $region15: #{mycell_forward.1} parent=0 // pred_check_branch
    %95 = sbr.rel (0) target = $region17
  $region16: #{mycell_forward.1} parent=0 // pred_region
    _
  $region17: #{mycell_forward.1} parent=0 // pred_fallthru
    _
  // Predicated region
  $region18: #{mycell_forward.1} parent=0 // pred_check
    _
  $region19: #{mycell_forward.1} parent=0 // pred_check_branch
    %97 = sbr.rel (0) target = $region21
  $region20: #{mycell_forward.1} parent=0 // pred_region
    _
  $region21: #{mycell_forward.1} parent=0 // pred_fallthru
    _

</llo_original>
